<compile_context>
chip_gen: v7x
topology: tpu7x:2x2x1
jax: 0.10.0
libtpu: 0.0.40
codegen_flags: <defaults>
</compile_context>

<pallas_src>
import functools

import jax
import jax.numpy as jnp
from jax import lax
from jax.experimental import pallas as pl
from jax.experimental.pallas import tpu as pltpu

EPS = 1e-5  # PyTorch BatchNorm2d default eps


def _round_up(x: int, m: int) -> int:
    return (x + m - 1) // m * m


def _pick_hw_tile(hw: int, n: int, block_rows: int):
    """Pick (TR, HWp): lane-dim tile length and padded HW extent (TR divides HWp)."""
    if hw % 128 == 0:
        # Lane-aligned tiling with TR | HW (no padded rows, no final slice copy).
        want_tiles = 2 if n == 1 else 1          # v7x megacore: >= 2 total grid steps
        tr = 128
        d = 128
        while d <= min(block_rows, hw):
            if hw % d == 0 and hw // d >= want_tiles:
                tr = d
            d += 128
        return tr, hw
    if hw <= 2 * block_rows:
        return hw, hw                            # single full-extent block (masked vst, no pad)
    tr = _round_up(block_rows, 128)
    return tr, _round_up(hw, tr)                 # zero rows: harmless (stats divide by true R)


# --------------------------------------------------------------------------------------
# Pass 1: stats only — matmul result never leaves VMEM, only (Cout, 2) per tile is stored
# --------------------------------------------------------------------------------------
def _stats_kernel(w_ref, p_ref, stats_ref):
    # w_ref    : (Cout, Kp)  bf16 folded weight (constant block)
    # p_ref    : (Kp, TR)    bf16 im2col patch tile (channel-major, lane dim = pixels)
    # stats_ref: (Cout, 2)   f32 per-tile stats; col 0 = sum, col 1 = sum of squares
    acc = jnp.dot(w_ref[...], p_ref[...], preferred_element_type=jnp.float32)  # (Cout, TR)
    stats_ref[:, 0:1] = jnp.sum(acc, axis=1, keepdims=True)
    stats_ref[:, 1:2] = jnp.sum(acc * acc, axis=1, keepdims=True)


# --------------------------------------------------------------------------------------
# Pass 2: recompute conv + fused BatchNorm apply, channel-major output written once
# --------------------------------------------------------------------------------------
def _conv_bn_kernel(w_ref, p_ref, scale_ref, shift_ref, out_ref):
    # scale/shift: (Cout, 1) f32, broadcast over the pixel (lane) dimension
    acc = jnp.dot(w_ref[...], p_ref[...], preferred_element_type=jnp.float32)  # (Cout, TR)
    out_ref[...] = (acc * scale_ref[...] + shift_ref[...]).astype(out_ref.dtype)


# --------------------------------------------------------------------------------------
# Wrapper: layout glue (pure data movement) + two pallas_calls + tiny O(Cout) BN math
# --------------------------------------------------------------------------------------
@functools.partial(jax.jit, static_argnames=("block_rows", "compute_dtype"))
def downsample(x_nchw, w_oihw, gamma, beta, *, block_rows: int = 1024,
               compute_dtype=jnp.bfloat16):
    """Conv2d(Cin->Cout, k=3, s=2, p=1, reflect, bias=False) + BatchNorm2d (batch stats)."""
    N, Cin, H, W = x_nchw.shape
    Cout = w_oihw.shape[0]
    Hout = (H + 2 - 3) // 2 + 1
    Wout = (W + 2 - 3) // 2 + 1
    HW = Hout * Wout
    R = N * HW                                   # BN population size (true pixels only)

    K = 9 * Cin                                  # contraction depth after folding 3x3 taps
    Kp = _round_up(K, 128)
    if K < 128 or (Kp - K) * 8 > K:              # never inflate the mem-bound patch slab >12.5%
        Kp = K

    TR, HWp = _pick_hw_tile(HW, N, block_rows)
    num_tiles = HWp // TR

    # ---- plain-JAX glue: reflect pad + stride-2 im2col, directly from NCHW (no transpose) ----
    xpad = jnp.pad(x_nchw.astype(compute_dtype),
                   ((0, 0), (0, 0), (1, 1), (1, 1)), mode="reflect")
    taps = [xpad[:, :, kh:kh + 2 * Hout - 1:2, kw:kw + 2 * Wout - 1:2]
            for kh in range(3) for kw in range(3)]            # each (N, Cin, Hout, Wout)
    patches = jnp.stack(taps, axis=1).reshape(N, K, HW)       # K index = tap*Cin + cin
    if Kp != K or HWp != HW:
        patches = jnp.pad(patches, ((0, 0), (0, Kp - K), (0, HWp - HW)))

    # folded weight (Cout, K) with K ordered (kh, kw, cin) to match the tap stacking
    w2d = jnp.transpose(w_oihw, (0, 2, 3, 1)).reshape(Cout, K).astype(compute_dtype)
    if Kp != K:
        w2d = jnp.pad(w2d, ((0, 0), (0, Kp - K)))

    cparams = pltpu.CompilerParams(
        dimension_semantics=("parallel", "parallel"),   # batch x row-tiles -> both TCs on v7x
        vmem_limit_bytes=32 * 1024 * 1024,              # explicit (v5e default 16 MiB); tiles
                                                        # stay far below the v7x 64 MiB/TC cap
    )

    # ---- Pass 1: per-tile per-channel sum / sumsq of the conv output ----
    pstats = pl.pallas_call(
        _stats_kernel,
        out_shape=jax.ShapeDtypeStruct((N, num_tiles, Cout, 2), jnp.float32),
        grid=(N, num_tiles),
        in_specs=[pl.BlockSpec((Cout, Kp), lambda n, i: (0, 0)),
                  pl.BlockSpec((None, Kp, TR), lambda n, i: (n, 0, i))],
        out_specs=pl.BlockSpec((None, None, Cout, 2), lambda n, i: (n, i, 0, 0)),
        compiler_params=cparams,
    )(w2d, patches)

    # ---- tiny O(Cout) BN math (fold batch stats + gamma/beta into scale/shift) ----
    tot = jnp.sum(pstats, axis=(0, 1))                  # (Cout, 2)
    mean = tot[:, 0] / R
    var = jnp.maximum(tot[:, 1] / R - mean * mean, 0.0)  # biased variance (train-mode norm)
    inv = lax.rsqrt(var + EPS)
    g = gamma.astype(jnp.float32)
    b = beta.astype(jnp.float32)
    scale = (g * inv).reshape(Cout, 1)
    shift = (b - mean * g * inv).reshape(Cout, 1)
    # TODO(synk): BatchNorm2d running_mean/running_var momentum update is not produced here
    # (training-forward with batch statistics only); track running stats outside if needed.

    # ---- Pass 2: recompute conv tile + fused BN apply, channel-major single write ----
    out = pl.pallas_call(
        _conv_bn_kernel,
        out_shape=jax.ShapeDtypeStruct((N, Cout, HWp), jnp.float32),
        grid=(N, num_tiles),
        in_specs=[pl.BlockSpec((Cout, Kp), lambda n, i: (0, 0)),
                  pl.BlockSpec((None, Kp, TR), lambda n, i: (n, 0, i)),
                  pl.BlockSpec((Cout, 1), lambda n, i: (0, 0)),
                  pl.BlockSpec((Cout, 1), lambda n, i: (0, 0))],
        out_specs=pl.BlockSpec((None, Cout, TR), lambda n, i: (n, 0, i)),
        compiler_params=cparams,
    )(w2d, patches, scale, shift)

    if HWp != HW:
        out = out[:, :, :HW]
    return out.reshape(N, Cout, Hout, Wout)             # already NCHW — free reshape


# --------------------------------------------------------------------------------------
# Pure-JAX reference (same bf16 MXU input precision, f32 accumulation / BN math)
# --------------------------------------------------------------------------------------
def _reference(x_nchw, w_oihw, gamma, beta, compute_dtype=jnp.bfloat16):
    x_nhwc = jnp.transpose(x_nchw, (0, 2, 3, 1)).astype(compute_dtype)
    xpad = jnp.pad(x_nhwc, ((0, 0), (1, 1), (1, 1), (0, 0)), mode="reflect")
    w_hwio = jnp.transpose(w_oihw, (2, 3, 1, 0)).astype(compute_dtype)
    conv = lax.conv_general_dilated(
        xpad, w_hwio, window_strides=(2, 2), padding="VALID",
        dimension_numbers=("NHWC", "HWIO", "NHWC"),
        preferred_element_type=jnp.float32)
    mean = jnp.mean(conv, axis=(0, 1, 2), keepdims=True)
    var = jnp.mean((conv - mean) ** 2, axis=(0, 1, 2), keepdims=True)
    y = (conv - mean) * lax.rsqrt(var + EPS) * gamma.astype(jnp.float32) \
        + beta.astype(jnp.float32)
    return jnp.transpose(y, (0, 3, 1, 2))


if __name__ == "__main__":
    key = jax.random.PRNGKey(0)
    kx, kw = jax.random.split(key)

    N, Cin, H, W = 2, 4, 16, 16
    Cout = 8

    x = jax.random.normal(kx, (N, Cin, H, W), dtype=jnp.float32)
    w = jax.random.normal(kw, (Cout, Cin, 3, 3), dtype=jnp.float32) * 0.1
    gamma = jnp.ones((Cout,), dtype=jnp.float32)   # PyTorch BN default init
    beta = jnp.zeros((Cout,), dtype=jnp.float32)

    out = jax.block_until_ready(downsample(x, w, gamma, beta))
    ref = jax.block_until_ready(_reference(x, w, gamma, beta))

    Hout = (H + 2 - 3) // 2 + 1
    Wout = (W + 2 - 3) // 2 + 1
    assert out.shape == (N, Cout, Hout, Wout), out.shape
    max_err = float(jnp.max(jnp.abs(out - ref)))
    assert jnp.allclose(out, ref, atol=2e-3, rtol=2e-3), f"mismatch vs reference: {max_err}"

    print("KERNEL_OK")
</pallas_src>

<mosaic_0001>
module attributes {stable_mosaic.version = 11 : i64} {
  func.func @_stats_kernel(%arg0: i32, %arg1: i32, %arg2: memref<8x36xbf16, #tpu.memory_space<vmem>>, %arg3: memref<1x36x64xbf16, #tpu.memory_space<vmem>>, %arg4: memref<1x1x8x2xf32, #tpu.memory_space<vmem>>) attributes {dimension_semantics = [#tpu.dimension_semantics<parallel>, #tpu.dimension_semantics<parallel>], iteration_bounds = array<i64: 2, 1>, scalar_prefetch = 0 : i64, scratch_operands = 0 : i64, tpu.core_type = #tpu.core_type<tc>, window_params = [{pipeline_mode = #tpu.pipeline_mode<synchronous>, transform_indices = @transform_0, window_bounds = array<i64: 8, 36>}, {transform_indices = @transform_1, window_bounds = array<i64: 1, 36, 64>}, {transform_indices = @transform_2, window_bounds = array<i64: 1, 1, 8, 2>}]} {
    %c0 = arith.constant 0 : index
    %c0_0 = arith.constant 0 : index
    %0 = vector.load %arg2[%c0, %c0_0] : memref<8x36xbf16, #tpu.memory_space<vmem>>, vector<8x36xbf16>
    %c0_1 = arith.constant 0 : index
    %c0_2 = arith.constant 0 : index
    %c0_3 = arith.constant 0 : index
    %1 = vector.load %arg3[%c0_1, %c0_2, %c0_3] : memref<1x36x64xbf16, #tpu.memory_space<vmem>>, vector<1x36x64xbf16>
    %2 = vector.shape_cast %1 : vector<1x36x64xbf16> to vector<36x64xbf16>
    %cst = arith.constant dense<0.000000e+00> : vector<8x64xf32>
    %3 = tpu.matmul %0, %2, %cst {dimension_numbers = #tpu.dot_dimension_numbers<[1], [0], [0], [1], [0, 0, 1, 1], [], []>} : vector<8x36xbf16>, vector<36x64xbf16>, vector<8x64xf32> -> vector<8x64xf32>
    %cst_4 = arith.constant dense<0.000000e+00> : vector<8xf32>
    %4 = vector.multi_reduction <add>, %3, %cst_4 [1] : vector<8x64xf32> to vector<8xf32>
    %5 = vector.shape_cast %4 : vector<8xf32> to vector<8x1xf32>
    %c0_5 = arith.constant 0 : index
    %c0_6 = arith.constant 0 : index
    %c0_7 = arith.constant 0 : index
    %c0_8 = arith.constant 0 : index
    %6 = vector.load %arg4[%c0_5, %c0_6, %c0_7, %c0_8] : memref<1x1x8x2xf32, #tpu.memory_space<vmem>>, vector<1x1x8x1xf32>
    %7 = vector.shape_cast %6 : vector<1x1x8x1xf32> to vector<8x1xf32>
    %8 = vector.shape_cast %5 : vector<8x1xf32> to vector<1x1x8x1xf32>
    tpu.vector_store %arg4[%c0_5, %c0_6, %c0_7, %c0_8], %8 {strides = array<i32>} : memref<1x1x8x2xf32, #tpu.memory_space<vmem>>, vector<1x1x8x1xf32>,
    %9 = arith.mulf %3, %3 : vector<8x64xf32>
    %cst_9 = arith.constant dense<0.000000e+00> : vector<8xf32>
    %10 = vector.multi_reduction <add>, %9, %cst_9 [1] : vector<8x64xf32> to vector<8xf32>
    %11 = vector.shape_cast %10 : vector<8xf32> to vector<8x1xf32>
    %c0_10 = arith.constant 0 : index
    %c0_11 = arith.constant 0 : index
    %c0_12 = arith.constant 0 : index
    %c1 = arith.constant 1 : index
    %12 = vector.load %arg4[%c0_10, %c0_11, %c0_12, %c1] : memref<1x1x8x2xf32, #tpu.memory_space<vmem>>, vector<1x1x8x1xf32>
    %13 = vector.shape_cast %12 : vector<1x1x8x1xf32> to vector<8x1xf32>
    %14 = vector.shape_cast %11 : vector<8x1xf32> to vector<1x1x8x1xf32>
    tpu.vector_store %arg4[%c0_10, %c0_11, %c0_12, %c1], %14 {strides = array<i32>} : memref<1x1x8x2xf32, #tpu.memory_space<vmem>>, vector<1x1x8x1xf32>,
    return
  }
  func.func @transform_0(%arg0: i32, %arg1: i32) -> (i32, i32) {
    %c0_i32 = arith.constant 0 : i32
    %c0_i32_0 = arith.constant 0 : i32
    %c0_i32_1 = arith.constant 0 : i32
    return %c0_i32, %c0_i32_0 : i32, i32
  }
  func.func @transform_1(%arg0: i32, %arg1: i32) -> (i32, i32, i32) {
    %c0_i32 = arith.constant 0 : i32
    %c0_i32_0 = arith.constant 0 : i32
    return %arg0, %c0_i32, %arg1 : i32, i32, i32
  }
  func.func @transform_2(%arg0: i32, %arg1: i32) -> (i32, i32, i32, i32) {
    %c0_i32 = arith.constant 0 : i32
    %c0_i32_0 = arith.constant 0 : i32
    %c0_i32_1 = arith.constant 0 : i32
    return %arg0, %arg1, %c0_i32, %c0_i32_0 : i32, i32, i32, i32
  }
}

module attributes {stable_mosaic.version = 11 : i64} {
  func.func @_conv_bn_kernel(%arg0: i32, %arg1: i32, %arg2: memref<8x36xbf16, #tpu.memory_space<vmem>>, %arg3: memref<1x36x64xbf16, #tpu.memory_space<vmem>>, %arg4: memref<8x1xf32, #tpu.memory_space<vmem>>, %arg5: memref<8x1xf32, #tpu.memory_space<vmem>>, %arg6: memref<1x8x64xf32, #tpu.memory_space<vmem>>) attributes {dimension_semantics = [#tpu.dimension_semantics<parallel>, #tpu.dimension_semantics<parallel>], iteration_bounds = array<i64: 2, 1>, scalar_prefetch = 0 : i64, scratch_operands = 0 : i64, tpu.core_type = #tpu.core_type<tc>, window_params = [{pipeline_mode = #tpu.pipeline_mode<synchronous>, transform_indices = @transform_0, window_bounds = array<i64: 8, 36>}, {transform_indices = @transform_1, window_bounds = array<i64: 1, 36, 64>}, {pipeline_mode = #tpu.pipeline_mode<synchronous>, transform_indices = @transform_2, window_bounds = array<i64: 8, 1>}, {pipeline_mode = #tpu.pipeline_mode<synchronous>, transform_indices = @transform_3, window_bounds = array<i64: 8, 1>}, {transform_indices = @transform_4, window_bounds = array<i64: 1, 8, 64>}]} {
    %c0 = arith.constant 0 : index
    %c0_0 = arith.constant 0 : index
    %0 = vector.load %arg2[%c0, %c0_0] : memref<8x36xbf16, #tpu.memory_space<vmem>>, vector<8x36xbf16>
    %c0_1 = arith.constant 0 : index
    %c0_2 = arith.constant 0 : index
    %c0_3 = arith.constant 0 : index
    %1 = vector.load %arg3[%c0_1, %c0_2, %c0_3] : memref<1x36x64xbf16, #tpu.memory_space<vmem>>, vector<1x36x64xbf16>
    %2 = vector.shape_cast %1 : vector<1x36x64xbf16> to vector<36x64xbf16>
    %cst = arith.constant dense<0.000000e+00> : vector<8x64xf32>
    %3 = tpu.matmul %0, %2, %cst {dimension_numbers = #tpu.dot_dimension_numbers<[1], [0], [0], [1], [0, 0, 1, 1], [], []>} : vector<8x36xbf16>, vector<36x64xbf16>, vector<8x64xf32> -> vector<8x64xf32>
    %c0_4 = arith.constant 0 : index
    %c0_5 = arith.constant 0 : index
    %4 = vector.load %arg4[%c0_4, %c0_5] : memref<8x1xf32, #tpu.memory_space<vmem>>, vector<8x1xf32>
    %5 = vector.broadcast %4 : vector<8x1xf32> to vector<8x64xf32>
    %6 = arith.mulf %3, %5 : vector<8x64xf32>
    %c0_6 = arith.constant 0 : index
    %c0_7 = arith.constant 0 : index
    %7 = vector.load %arg5[%c0_6, %c0_7] : memref<8x1xf32, #tpu.memory_space<vmem>>, vector<8x1xf32>
    %8 = vector.broadcast %7 : vector<8x1xf32> to vector<8x64xf32>
    %9 = arith.addf %6, %8 : vector<8x64xf32>
    %c0_8 = arith.constant 0 : index
    %c0_9 = arith.constant 0 : index
    %c0_10 = arith.constant 0 : index
    %10 = vector.load %arg6[%c0_8, %c0_9, %c0_10] : memref<1x8x64xf32, #tpu.memory_space<vmem>>, vector<1x8x64xf32>
    %11 = vector.shape_cast %10 : vector<1x8x64xf32> to vector<8x64xf32>
    %12 = vector.shape_cast %9 : vector<8x64xf32> to vector<1x8x64xf32>
    tpu.vector_store %arg6[%c0_8, %c0_9, %c0_10], %12 {strides = array<i32>} : memref<1x8x64xf32, #tpu.memory_space<vmem>>, vector<1x8x64xf32>,
    return
  }
  func.func @transform_0(%arg0: i32, %arg1: i32) -> (i32, i32) {
    %c0_i32 = arith.constant 0 : i32
    %c0_i32_0 = arith.constant 0 : i32
    %c0_i32_1 = arith.constant 0 : i32
    return %c0_i32, %c0_i32_0 : i32, i32
  }
  func.func @transform_1(%arg0: i32, %arg1: i32) -> (i32, i32, i32) {
    %c0_i32 = arith.constant 0 : i32
    %c0_i32_0 = arith.constant 0 : i32
    return %arg0, %c0_i32, %arg1 : i32, i32, i32
  }
  func.func @transform_2(%arg0: i32, %arg1: i32) -> (i32, i32) {
    %c0_i32 = arith.constant 0 : i32
    %c0_i32_0 = arith.constant 0 : i32
    %c0_i32_1 = arith.constant 0 : i32
    return %c0_i32, %c0_i32_0 : i32, i32
  }
  func.func @transform_3(%arg0: i32, %arg1: i32) -> (i32, i32) {
    %c0_i32 = arith.constant 0 : i32
    %c0_i32_0 = arith.constant 0 : i32
    %c0_i32_1 = arith.constant 0 : i32
    return %c0_i32, %c0_i32_0 : i32, i32
  }
  func.func @transform_4(%arg0: i32, %arg1: i32) -> (i32, i32, i32) {
    %c0_i32 = arith.constant 0 : i32
    %c0_i32_0 = arith.constant 0 : i32
    return %arg0, %c0_i32, %arg1 : i32, i32, i32
  }
}

</mosaic_0001>

<llo_original>
// kernel: downsample.2
$region0: #{downsample.2}
  #allocation0 [shape = 'u32[]', space=smem, size = 0x4, offset = 0x4, fixed_abs, tag = 'smem constant byte address 0x4 - core index']
  #allocation1 [shape = 'u32[144,128]{1,0:T(1,128)}', space=vmem, size = 0x12000, scoped, tag = 'internal scratch']
  %s0 = inlined_call_operand.vmem [shape: bf16[8,36], index: 0, kind: input, shape index: {}]
  %s1 = inlined_call_operand.vmem [shape: bf16[2,36,64], index: 1, kind: input, shape index: {}]
  %s2 = inlined_call_operand.vmem [shape: f32[2,1,8,2], index: 2, kind: output, shape index: {}]
  %s3 = sld [smem:[#allocation0]]
  $region41: #{downsample.2} parent=0
    _
  %s5 = ssub.s32 1, %s3
  %s6 = scalar_select 0, %s5, %s3
  loop: start=0, step=1, limit=4
  $region2: #{downsample.2} parent=0 // loop_pre_header
    _
  $region3: #{downsample.2} parent=0 // loop_header
    %s8 = sphi 0, %s12
    %p9 = scmp.ge.s32.totalorder %s8, 4
    %s15 = sphi 0, %s27
    %s16 = sphi 0, %s23
    %s17 = sphi 0, %s15
    %s18 = sphi 0, %s16
    %s19 = sphi 0, %s17
    %s20 = sphi 0, %s18
    %s28 = sphi 0, %s28
    %s30 = sphi 0, %s28
    %s31 = sphi 0, %s30
    %s45 = sphi 0, %s31
    %s53 = sphi 0, %s55
    %s56 = sphi 0, %s53
    %s57 = sphi 0, %s56
    %s73 = sphi 0, %s57
    %s81 = sphi 0, %s83
    %s84 = sphi 0, %s81
    %s85 = sphi 0, %s84
    %s101 = sphi 0, %s85
  $region4: #{downsample.2} parent=0 // loop_header_branch
    %11 = sbr.rel (%p9) target = $region8
  $region5: #{downsample.2} parent=0 // loop_body
    %s13 = ssub.s32 %s8, 1
    %s14 = ssub.s32 %s8, 2
    %s21 = sadd.s32 1, %s16
    %p22 = scmp.ge.s32.totalorder %s21, 1
    %s23 = scalar_select %p22, 0, %s21
    %s24 = sadd.s32 1, %s15
    %s25 = scalar_select %p22, %s24, %s15
    %p26 = scmp.ge.s32.totalorder %s25, 2
    %s27 = scalar_select %p26, 0, %s25
    %s29 = sadd.s32 %s28, 1
    %p32 = scmp.eq.s32.totalorder %s8, 1
    %p33 = scmp.ne.s32.totalorder %s28, %s30
    %p34 = scmp.eq.s32.totalorder %s8, 0
    %p35 = por %p33, %p34
    %p36 = scmp.ne.s32.totalorder %s28, %s30
    %p37 = scmp.eq.s32.totalorder %s13, 1
    %p38 = por %p36, %p37
    %p39 = scmp.ne.s32.totalorder %s30, %s31
    %p40 = scmp.eq.s32.totalorder %s13, 0
    %p41 = por %p39, %p40
    %p42 = scmp.ne.s32.totalorder %s30, %s31
    %p43 = scmp.eq.s32.totalorder %s14, 1
    %p44 = por %p42, %p43
    %p46 = scmp.ne.s32.totalorder %s31, %s45
    %p47 = scmp.eq.s32.totalorder %s14, 0
    %p48 = por %p46, %p47
    %s49 = ssub.s32 %s15, %s27
    %s50 = ssub.s32 %s16, %s23
    %s51 = sor.u32 %s49, %s50
    %p52 = scmp.eq.s32.totalorder %s51, 0
    %s54 = sadd.s32 %s53, 1
    %s55 = scalar_select %p52, %s53, %s54
    %p58 = pneg %p52
    %p59 = scmp.eq.s32.totalorder %s8, 1
    %p60 = por %p58, %p59
    %p61 = scmp.ne.s32.totalorder %s53, %s56
    %p62 = scmp.eq.s32.totalorder %s8, 0
    %p63 = por %p61, %p62
    %p64 = scmp.ne.s32.totalorder %s53, %s56
    %p65 = scmp.eq.s32.totalorder %s13, 1
    %p66 = por %p64, %p65
    %p67 = scmp.ne.s32.totalorder %s56, %s57
    %p68 = scmp.eq.s32.totalorder %s13, 0
    %p69 = por %p67, %p68
    %p70 = scmp.ne.s32.totalorder %s56, %s57
    %p71 = scmp.eq.s32.totalorder %s14, 1
    %p72 = por %p70, %p71
    %p74 = scmp.ne.s32.totalorder %s57, %s73
    %p75 = scmp.eq.s32.totalorder %s14, 0
    %p76 = por %p74, %p75
    %s77 = ssub.s32 %s15, %s27
    %s78 = ssub.s32 %s16, %s23
    %s79 = sor.u32 %s77, %s78
    %p80 = scmp.eq.s32.totalorder %s79, 0
    %s82 = sadd.s32 %s81, 1
    %s83 = scalar_select %p80, %s81, %s82
    %p86 = pneg %p80
    %p87 = scmp.eq.s32.totalorder %s8, 1
    %p88 = por %p86, %p87
    %p89 = scmp.ne.s32.totalorder %s81, %s84
    %p90 = scmp.eq.s32.totalorder %s8, 0
    %p91 = por %p89, %p90
    %p92 = scmp.ne.s32.totalorder %s81, %s84
    %p93 = scmp.eq.s32.totalorder %s13, 1
    %p94 = por %p92, %p93
    %p95 = scmp.ne.s32.totalorder %s84, %s85
    %p96 = scmp.eq.s32.totalorder %s13, 0
    %p97 = por %p95, %p96
    %p98 = scmp.ne.s32.totalorder %s84, %s85
    %p99 = scmp.eq.s32.totalorder %s14, 1
    %p100 = por %p98, %p99
    %p102 = scmp.ne.s32.totalorder %s85, %s101
    %p103 = scmp.eq.s32.totalorder %s14, 0
    %p104 = por %p102, %p103
    %p105 = scmp.le.s32.totalorder 1, %s8
    %p106 = scmp.lt.s32.totalorder %s8, 3
    %p107 = pnand %p105, %p106
    %p108 = pneg %p107
    // Predicated region
    $region9: #{downsample.2} parent=5 // pred_check
      _
    $region10: #{downsample.2} parent=5 // pred_check_branch
      %110 = sbr.rel (%p107) target = $region12
    $region11: #{downsample.2} parent=5 // pred_region
      %s111 = ssub.s32 %s8, 1
      // Predicated region
      $region13: #{downsample.2} parent=11 // pred_check
        %p112 = pneg %p41
      $region14: #{downsample.2} parent=11 // pred_check_branch
        %114 = sbr.rel (%p112) target = $region16
      $region15: #{downsample.2} parent=11 // pred_region
        _
      $region16: #{downsample.2} parent=11 // pred_fallthru
        _
    $region12: #{downsample.2} parent=5 // pred_fallthru
      _
    %p115 = scmp.lt.s32.totalorder %s8, 2
    // Predicated region
    $region17: #{downsample.2} parent=5 // pred_check
      %p116 = pneg %p115
    $region18: #{downsample.2} parent=5 // pred_check_branch
      %118 = sbr.rel (%p116) target = $region20
    $region19: #{downsample.2} parent=5 // pred_region
      // Predicated region
      $region21: #{downsample.2} parent=19 // pred_check
        %p119 = pneg %p63
      $region22: #{downsample.2} parent=19 // pred_check_branch
        %121 = sbr.rel (%p119) target = $region24
      $region23: #{downsample.2} parent=19 // pred_region
        %p122 = scmp.lt.s32.totalorder %s15, 1
        %s123 = scalar_select %p122, %s15, 1
        %p124 = scmp.lt.s32.totalorder %s16, 0
        %s125 = scalar_select %p124, %s16, 0
        %s126 = smul.addr %s123, 5
        %s127 = sadd.s32 %s125, %s126
        %s128 = smul.addr %s127, 4
        %s129 = scalar_lea.vmem %s1, %s128
      $region24: #{downsample.2} parent=19 // pred_fallthru
        _
    $region20: #{downsample.2} parent=5 // pred_fallthru
      _
    %p130 = scmp.le.s32.totalorder 1, %s8
    %p131 = scmp.lt.s32.totalorder %s8, 3
    %p132 = pnand %p130, %p131
    %p133 = pneg %p132
    // Predicated region
    $region25: #{downsample.2} parent=5 // pred_check
      _
    $region26: #{downsample.2} parent=5 // pred_check_branch
      %135 = sbr.rel (%p132) target = $region28
    $region27: #{downsample.2} parent=5 // pred_region
      %s136 = ssub.s32 %s8, 1
      %p137 = pneg %p41
      %p138 = pneg %p38
      %p139 = scmp.lt.s32.totalorder %s17, 1
      %s140 = scalar_select %p139, %s17, 1
      %p141 = scmp.lt.s32.totalorder %s18, 0
      %s142 = scalar_select %p141, %s18, 0
      %s143 = smul.addr %s140, 5
      %s144 = sadd.s32 %s142, %s143
      %s145 = smul.addr %s144, 4
      %s146 = scalar_lea.vmem %s1, %s145
      %p147 = pneg %p69
      %p148 = pneg %p66
      %p149 = pneg %p97
      %p150 = pneg %p94
      %p151 = scmp.lt.s32.totalorder %s17, 1
      %s152 = scalar_select %p151, %s17, 1
      %p153 = scmp.lt.s32.totalorder %s18, 0
      %s154 = scalar_select %p153, %s18, 0
      %s155 = sadd.s32 %s154, %s152
      %s156 = smul.addr %s155, 8
      %s157 = scalar_lea.vmem %s2, %s156
      %p158 = scmp.lt.s32.totalorder %s17, 1
      %s159 = scalar_select %p158, %s17, 1
      %p160 = scmp.lt.s32.totalorder %s18, 0
      %s161 = scalar_select %p160, %s18, 0
      %s162 = smul.addr %s159, 5
      %s163 = sadd.s32 %s161, %s162
      %s164 = smul.addr %s163, 4
      %s165 = scalar_lea.vmem %s1, %s164
      %p166 = scmp.lt.s32.totalorder %s17, 1
      %s167 = scalar_select %p166, %s17, 1
      %p168 = scmp.lt.s32.totalorder %s18, 0
      %s169 = scalar_select %p168, %s18, 0
      %s170 = sadd.s32 %s169, %s167
      %s171 = smul.addr %s170, 8
      %s172 = scalar_lea.vmem %s2, %s171
      %v174 = vld [vmem:[%s0] sm:$0xf]
      %v175 = vld [vmem:[%s165] sm:$0xf]
      %v176 = vld [vmem:[%s165 + $0x4] sm:$0xf]
      %v177 = vld [vmem:[%s165 + $0x8] sm:$0xf]
      %v178 = vld [vmem:[%s165 + $0xc] sm:$0xf]
      %v179 = vld [vmem:[%s165 + $0x10] sm:$0x3]
      %v185 = vunpack.c.l.b16 %v175
      %v186 = vunpack.c.l.b16 %v176
      %v187 = vunpack.c.l.b16 %v177
      %v188 = vunpack.c.l.b16 %v178
      %v189 = vunpack.c.l.b16 %v179
      %v190 = vpack.c.b16 %v186, %v185
      %v191 = vpack.c.b16 %v188, %v187
      %v192 = vpack.c.b16 %v189, %v189
      %vm195 = vcmask 293888
      %v197 = vsel %vm195, %v174, 0
      %vm199 = vcmask 1041408
      %v201 = vsel %vm199, %v192, 0
      %203 = vmatprep.subr.bf16.mxu0 0
      %204 = vmatpush1.bf16.msra.mxu0 %v190
      %205 = vmatprep.subr.bf16.mxu0 0
      %206 = vmatpush1.bf16.msra.mxu0 %v191
      %207 = vmatprep.subr.bf16.mxu0 0
      %208 = vmatpush1.bf16.msra.mxu0 %v201
      %209 = vmatprep.subr.bf16.mxu0 0
      %210 = vmatpush1.bf16.msra.mxu0 0
      %211 = vmatprep.subr.bf16.mxu0 0
      %212 = vmatpush1.bf16.msra.mxu0 0
      %213 = vmatprep.subr.bf16.mxu0 0
      %214 = vmatpush1.bf16.msra.mxu0 0
      %215 = vmatprep.subr.bf16.mxu0 0
      %216 = vmatpush1.bf16.msra.mxu0 0
      %217 = vmatprep.subr.bf16.mxu0 0
      %218 = vmatpush1.bf16.msra.mxu0 0
      %219 = vmatprep.subr.bf16.mxu0 0
      %220 = vmatpush1.bf16.msra.mxu0 0
      %221 = vmatprep.subr.bf16.mxu0 0
      %222 = vmatpush1.bf16.msra.mxu0 0
      %223 = vmatprep.subr.bf16.mxu0 0
      %224 = vmatpush1.bf16.msra.mxu0 0
      %225 = vmatprep.subr.bf16.mxu0 0
      %226 = vmatpush1.bf16.msra.mxu0 0
      %227 = vmatprep.subr.bf16.mxu0 0
      %228 = vmatpush1.bf16.msra.mxu0 0
      %229 = vmatprep.subr.bf16.mxu0 0
      %230 = vmatpush1.bf16.msra.mxu0 0
      %231 = vmatprep.subr.bf16.mxu0 0
      %232 = vmatpush1.bf16.msra.mxu0 0
      %233 = vmatprep.subr.bf16.mxu0 0
      %234 = vmatpush1.bf16.msra.mxu0 0
      %235 = vmatprep.mubr.bf16.mxu0 0
      %236 = vmatmul.mubr.bf16.gmra.mrb[0].mxu0 %v197
      %v237 = vpop.f32.mrb[0].mxu0
      %v238 = vadd.f32 0.0, %v237
      %v239 = vpop.f32.mrb[0].mxu0
      %v240 = vpop.f32.mrb[0].mxu0
      %v241 = vpop.f32.mrb[0].mxu0
      %242 = vdwg.mxu0
      %vm243 = vcmask 523264
      %v244 = vsel %vm243, %v238, 0.0
      %245 = vadd.xlane.f32.xlu0 %v244
      %v246 = vpop.xlane.xlu0 %245
      %vm247 = vcmask 7168
      %248 = vst.msk [vmem:[%s172] sm:$0xff] %vm247, %v246
      %v249 = vmul.f32 %v238, %v238
      %v250 = vsel %vm243, %v249, 0.0
      %251 = vadd.xlane.f32.xlu0 %v250
      %v252 = vpop.xlane.xlu0 %251
      %vm253 = vcmask 15368
      %254 = vst.msk [vmem:[%s172] sm:$0xff] %vm253, %v252
      %p255 = scmp.lt.s32.totalorder %s17, 1
      %s256 = scalar_select %p255, %s17, 1
      %p257 = scmp.lt.s32.totalorder %s18, 0
      %s258 = scalar_select %p257, %s18, 0
      %s259 = sadd.s32 %s258, %s256
      %s260 = smul.addr %s259, 8
      %s261 = scalar_lea.vmem %s2, %s260
      // Predicated region
      $region29: #{downsample.2} parent=27 // pred_check
        %p262 = pneg %p94
      $region30: #{downsample.2} parent=27 // pred_check_branch
        %264 = sbr.rel (%p262) target = $region32
      $region31: #{downsample.2} parent=27 // pred_region
        _
      $region32: #{downsample.2} parent=27 // pred_fallthru
        _
    $region28: #{downsample.2} parent=5 // pred_fallthru
      _
    %p265 = scmp.le.s32.totalorder 2, %s8
    // Predicated region
    $region33: #{downsample.2} parent=5 // pred_check
      %p266 = pneg %p265
    $region34: #{downsample.2} parent=5 // pred_check_branch
      %268 = sbr.rel (%p266) target = $region36
    $region35: #{downsample.2} parent=5 // pred_region
      %s269 = ssub.s32 %s8, 2
      // Predicated region
      $region37: #{downsample.2} parent=35 // pred_check
        %p270 = pneg %p100
      $region38: #{downsample.2} parent=35 // pred_check_branch
        %272 = sbr.rel (%p270) target = $region40
      $region39: #{downsample.2} parent=35 // pred_region
        %p273 = scmp.lt.s32.totalorder %s19, 1
        %s274 = scalar_select %p273, %s19, 1
        %p275 = scmp.lt.s32.totalorder %s20, 0
        %s276 = scalar_select %p275, %s20, 0
        %s277 = sadd.s32 %s276, %s274
        %s278 = smul.addr %s277, 8
        %s279 = scalar_lea.vmem %s2, %s278
      $region40: #{downsample.2} parent=35 // pred_fallthru
        _
    $region36: #{downsample.2} parent=5 // pred_fallthru
      _
  $region6: #{downsample.2} parent=0 // loop_footer
    %s12 = sadd.s32 1, %s8
  $region7: #{downsample.2} parent=0 // loop_footer_branch
    %7 = sbr.rel target = $region3
  $region8: #{downsample.2} parent=0 // loop_exit
    _

// kernel: downsample.3
$region0: #{downsample.3}
  #allocation0 [shape = 'u32[]', space=smem, size = 0x4, offset = 0x4, fixed_abs, tag = 'smem constant byte address 0x4 - core index']
  #allocation1 [shape = 'u32[144,128]{1,0:T(1,128)}', space=vmem, size = 0x12000, scoped, tag = 'internal scratch']
  %s0 = inlined_call_operand.vmem [shape: bf16[8,36], index: 0, kind: input, shape index: {}]
  %s1 = inlined_call_operand.vmem [shape: bf16[2,36,64], index: 1, kind: input, shape index: {}]
  %s2 = inlined_call_operand.vmem [shape: f32[8,1], index: 2, kind: input, shape index: {}]
  %s3 = inlined_call_operand.vmem [shape: f32[8,1], index: 3, kind: input, shape index: {}]
  %s4 = inlined_call_operand.vmem [shape: f32[2,8,64], index: 4, kind: output, shape index: {}]
  %s5 = sld [smem:[#allocation0]]
  $region49: #{downsample.3} parent=0
    _
  %s7 = ssub.s32 1, %s5
  %s8 = scalar_select 0, %s7, %s5
  loop: start=0, step=1, limit=4
  $region2: #{downsample.3} parent=0 // loop_pre_header
    _
  $region3: #{downsample.3} parent=0 // loop_header
    %s10 = sphi 0, %s14
    %p11 = scmp.ge.s32.totalorder %s10, 4
    %s17 = sphi 0, %s29
    %s18 = sphi 0, %s25
    %s19 = sphi 0, %s17
    %s20 = sphi 0, %s18
    %s21 = sphi 0, %s19
    %s22 = sphi 0, %s20
    %s30 = sphi 0, %s30
    %s32 = sphi 0, %s30
    %s33 = sphi 0, %s32
    %s47 = sphi 0, %s33
    %s55 = sphi 0, %s57
    %s58 = sphi 0, %s55
    %s59 = sphi 0, %s58
    %s75 = sphi 0, %s59
    %s79 = sphi 0, %s79
    %s81 = sphi 0, %s79
    %s82 = sphi 0, %s81
    %s96 = sphi 0, %s82
    %s100 = sphi 0, %s100
    %s102 = sphi 0, %s100
    %s103 = sphi 0, %s102
    %s117 = sphi 0, %s103
    %s125 = sphi 0, %s127
    %s128 = sphi 0, %s125
    %s129 = sphi 0, %s128
    %s145 = sphi 0, %s129
  $region4: #{downsample.3} parent=0 // loop_header_branch
    %13 = sbr.rel (%p11) target = $region8
  $region5: #{downsample.3} parent=0 // loop_body
    %s15 = ssub.s32 %s10, 1
    %s16 = ssub.s32 %s10, 2
    %s23 = sadd.s32 1, %s18
    %p24 = scmp.ge.s32.totalorder %s23, 1
    %s25 = scalar_select %p24, 0, %s23
    %s26 = sadd.s32 1, %s17
    %s27 = scalar_select %p24, %s26, %s17
    %p28 = scmp.ge.s32.totalorder %s27, 2
    %s29 = scalar_select %p28, 0, %s27
    %s31 = sadd.s32 %s30, 1
    %p34 = scmp.eq.s32.totalorder %s10, 1
    %p35 = scmp.ne.s32.totalorder %s30, %s32
    %p36 = scmp.eq.s32.totalorder %s10, 0
    %p37 = por %p35, %p36
    %p38 = scmp.ne.s32.totalorder %s30, %s32
    %p39 = scmp.eq.s32.totalorder %s15, 1
    %p40 = por %p38, %p39
    %p41 = scmp.ne.s32.totalorder %s32, %s33
    %p42 = scmp.eq.s32.totalorder %s15, 0
    %p43 = por %p41, %p42
    %p44 = scmp.ne.s32.totalorder %s32, %s33
    %p45 = scmp.eq.s32.totalorder %s16, 1
    %p46 = por %p44, %p45
    %p48 = scmp.ne.s32.totalorder %s33, %s47
    %p49 = scmp.eq.s32.totalorder %s16, 0
    %p50 = por %p48, %p49
    %s51 = ssub.s32 %s17, %s29
    %s52 = ssub.s32 %s18, %s25
    %s53 = sor.u32 %s51, %s52
    %p54 = scmp.eq.s32.totalorder %s53, 0
    %s56 = sadd.s32 %s55, 1
    %s57 = scalar_select %p54, %s55, %s56
    %p60 = pneg %p54
    %p61 = scmp.eq.s32.totalorder %s10, 1
    %p62 = por %p60, %p61
    %p63 = scmp.ne.s32.totalorder %s55, %s58
    %p64 = scmp.eq.s32.totalorder %s10, 0
    %p65 = por %p63, %p64
    %p66 = scmp.ne.s32.totalorder %s55, %s58
    %p67 = scmp.eq.s32.totalorder %s15, 1
    %p68 = por %p66, %p67
    %p69 = scmp.ne.s32.totalorder %s58, %s59
    %p70 = scmp.eq.s32.totalorder %s15, 0
    %p71 = por %p69, %p70
    %p72 = scmp.ne.s32.totalorder %s58, %s59
    %p73 = scmp.eq.s32.totalorder %s16, 1
    %p74 = por %p72, %p73
    %p76 = scmp.ne.s32.totalorder %s59, %s75
    %p77 = scmp.eq.s32.totalorder %s16, 0
    %p78 = por %p76, %p77
    %s80 = sadd.s32 %s79, 1
    %p83 = scmp.eq.s32.totalorder %s10, 1
    %p84 = scmp.ne.s32.totalorder %s79, %s81
    %p85 = scmp.eq.s32.totalorder %s10, 0
    %p86 = por %p84, %p85
    %p87 = scmp.ne.s32.totalorder %s79, %s81
    %p88 = scmp.eq.s32.totalorder %s15, 1
    %p89 = por %p87, %p88
    %p90 = scmp.ne.s32.totalorder %s81, %s82
    %p91 = scmp.eq.s32.totalorder %s15, 0
    %p92 = por %p90, %p91
    %p93 = scmp.ne.s32.totalorder %s81, %s82
    %p94 = scmp.eq.s32.totalorder %s16, 1
    %p95 = por %p93, %p94
    %p97 = scmp.ne.s32.totalorder %s82, %s96
    %p98 = scmp.eq.s32.totalorder %s16, 0
    %p99 = por %p97, %p98
    %s101 = sadd.s32 %s100, 1
    %p104 = scmp.eq.s32.totalorder %s10, 1
    %p105 = scmp.ne.s32.totalorder %s100, %s102
    %p106 = scmp.eq.s32.totalorder %s10, 0
    %p107 = por %p105, %p106
    %p108 = scmp.ne.s32.totalorder %s100, %s102
    %p109 = scmp.eq.s32.totalorder %s15, 1
    %p110 = por %p108, %p109
    %p111 = scmp.ne.s32.totalorder %s102, %s103
    %p112 = scmp.eq.s32.totalorder %s15, 0
    %p113 = por %p111, %p112
    %p114 = scmp.ne.s32.totalorder %s102, %s103
    %p115 = scmp.eq.s32.totalorder %s16, 1
    %p116 = por %p114, %p115
    %p118 = scmp.ne.s32.totalorder %s103, %s117
    %p119 = scmp.eq.s32.totalorder %s16, 0
    %p120 = por %p118, %p119
    %s121 = ssub.s32 %s17, %s29
    %s122 = ssub.s32 %s18, %s25
    %s123 = sor.u32 %s121, %s122
    %p124 = scmp.eq.s32.totalorder %s123, 0
    %s126 = sadd.s32 %s125, 1
    %s127 = scalar_select %p124, %s125, %s126
    %p130 = pneg %p124
    %p131 = scmp.eq.s32.totalorder %s10, 1
    %p132 = por %p130, %p131
    %p133 = scmp.ne.s32.totalorder %s125, %s128
    %p134 = scmp.eq.s32.totalorder %s10, 0
    %p135 = por %p133, %p134
    %p136 = scmp.ne.s32.totalorder %s125, %s128
    %p137 = scmp.eq.s32.totalorder %s15, 1
    %p138 = por %p136, %p137
    %p139 = scmp.ne.s32.totalorder %s128, %s129
    %p140 = scmp.eq.s32.totalorder %s15, 0
    %p141 = por %p139, %p140
    %p142 = scmp.ne.s32.totalorder %s128, %s129
    %p143 = scmp.eq.s32.totalorder %s16, 1
    %p144 = por %p142, %p143
    %p146 = scmp.ne.s32.totalorder %s129, %s145
    %p147 = scmp.eq.s32.totalorder %s16, 0
    %p148 = por %p146, %p147
    %p149 = scmp.le.s32.totalorder 1, %s10
    %p150 = scmp.lt.s32.totalorder %s10, 3
    %p151 = pnand %p149, %p150
    %p152 = pneg %p151
    // Predicated region
    $region9: #{downsample.3} parent=5 // pred_check
      _
    $region10: #{downsample.3} parent=5 // pred_check_branch
      %154 = sbr.rel (%p151) target = $region12
    $region11: #{downsample.3} parent=5 // pred_region
      %s155 = ssub.s32 %s10, 1
      // Predicated region
      $region13: #{downsample.3} parent=11 // pred_check
        %p156 = pneg %p43
      $region14: #{downsample.3} parent=11 // pred_check_branch
        %158 = sbr.rel (%p156) target = $region16
      $region15: #{downsample.3} parent=11 // pred_region
        _
      $region16: #{downsample.3} parent=11 // pred_fallthru
        _
      // Predicated region
      $region17: #{downsample.3} parent=11 // pred_check
        %p159 = pneg %p92
      $region18: #{downsample.3} parent=11 // pred_check_branch
        %161 = sbr.rel (%p159) target = $region20
      $region19: #{downsample.3} parent=11 // pred_region
        _
      $region20: #{downsample.3} parent=11 // pred_fallthru
        _
      // Predicated region
      $region21: #{downsample.3} parent=11 // pred_check
        %p162 = pneg %p113
      $region22: #{downsample.3} parent=11 // pred_check_branch
        %164 = sbr.rel (%p162) target = $region24
      $region23: #{downsample.3} parent=11 // pred_region
        _
      $region24: #{downsample.3} parent=11 // pred_fallthru
        _
    $region12: #{downsample.3} parent=5 // pred_fallthru
      _
    %p165 = scmp.lt.s32.totalorder %s10, 2
    // Predicated region
    $region25: #{downsample.3} parent=5 // pred_check
      %p166 = pneg %p165
    $region26: #{downsample.3} parent=5 // pred_check_branch
      %168 = sbr.rel (%p166) target = $region28
    $region27: #{downsample.3} parent=5 // pred_region
      // Predicated region
      $region29: #{downsample.3} parent=27 // pred_check
        %p169 = pneg %p65
      $region30: #{downsample.3} parent=27 // pred_check_branch
        %171 = sbr.rel (%p169) target = $region32
      $region31: #{downsample.3} parent=27 // pred_region
        %p172 = scmp.lt.s32.totalorder %s17, 1
        %s173 = scalar_select %p172, %s17, 1
        %p174 = scmp.lt.s32.totalorder %s18, 0
        %s175 = scalar_select %p174, %s18, 0
        %s176 = smul.addr %s173, 5
        %s177 = sadd.s32 %s175, %s176
        %s178 = smul.addr %s177, 4
        %s179 = scalar_lea.vmem %s1, %s178
      $region32: #{downsample.3} parent=27 // pred_fallthru
        _
    $region28: #{downsample.3} parent=5 // pred_fallthru
      _
    %p180 = scmp.le.s32.totalorder 1, %s10
    %p181 = scmp.lt.s32.totalorder %s10, 3
    %p182 = pnand %p180, %p181
    %p183 = pneg %p182
    // Predicated region
    $region33: #{downsample.3} parent=5 // pred_check
      _
    $region34: #{downsample.3} parent=5 // pred_check_branch
      %185 = sbr.rel (%p182) target = $region36
    $region35: #{downsample.3} parent=5 // pred_region
      %s186 = ssub.s32 %s10, 1
      %p187 = pneg %p43
      %p188 = pneg %p40
      %p189 = scmp.lt.s32.totalorder %s19, 1
      %s190 = scalar_select %p189, %s19, 1
      %p191 = scmp.lt.s32.totalorder %s20, 0
      %s192 = scalar_select %p191, %s20, 0
      %s193 = smul.addr %s190, 5
      %s194 = sadd.s32 %s192, %s193
      %s195 = smul.addr %s194, 4
      %s196 = scalar_lea.vmem %s1, %s195
      %p197 = pneg %p71
      %p198 = pneg %p68
      %p199 = pneg %p92
      %p200 = pneg %p89
      %p201 = pneg %p113
      %p202 = pneg %p110
      %p203 = pneg %p141
      %p204 = pneg %p138
      %p205 = scmp.lt.s32.totalorder %s19, 1
      %s206 = scalar_select %p205, %s19, 1
      %p207 = scmp.lt.s32.totalorder %s20, 0
      %s208 = scalar_select %p207, %s20, 0
      %s209 = sadd.s32 %s208, %s206
      %s210 = smul.addr %s209, 8
      %s211 = scalar_lea.vmem %s4, %s210
      %p212 = scmp.lt.s32.totalorder %s19, 1
      %s213 = scalar_select %p212, %s19, 1
      %p214 = scmp.lt.s32.totalorder %s20, 0
      %s215 = scalar_select %p214, %s20, 0
      %s216 = smul.addr %s213, 5
      %s217 = sadd.s32 %s215, %s216
      %s218 = smul.addr %s217, 4
      %s219 = scalar_lea.vmem %s1, %s218
      %p220 = scmp.lt.s32.totalorder %s19, 1
      %s221 = scalar_select %p220, %s19, 1
      %p222 = scmp.lt.s32.totalorder %s20, 0
      %s223 = scalar_select %p222, %s20, 0
      %s224 = sadd.s32 %s223, %s221
      %s225 = smul.addr %s224, 8
      %s226 = scalar_lea.vmem %s4, %s225
      %v228 = vld [vmem:[%s0] sm:$0xf]
      %v229 = vld [vmem:[%s219] sm:$0xf]
      %v230 = vld [vmem:[%s219 + $0x4] sm:$0xf]
      %v231 = vld [vmem:[%s219 + $0x8] sm:$0xf]
      %v232 = vld [vmem:[%s219 + $0xc] sm:$0xf]
      %v233 = vld [vmem:[%s219 + $0x10] sm:$0x3]
      %v239 = vunpack.c.l.b16 %v229
      %v240 = vunpack.c.l.b16 %v230
      %v241 = vunpack.c.l.b16 %v231
      %v242 = vunpack.c.l.b16 %v232
      %v243 = vunpack.c.l.b16 %v233
      %v244 = vpack.c.b16 %v240, %v239
      %v245 = vpack.c.b16 %v242, %v241
      %v246 = vpack.c.b16 %v243, %v243
      %vm249 = vcmask 293888
      %v251 = vsel %vm249, %v228, 0
      %vm253 = vcmask 1041408
      %v255 = vsel %vm253, %v246, 0
      %257 = vmatprep.subr.bf16.mxu0 0
      %258 = vmatpush1.bf16.msra.mxu0 %v244
      %259 = vmatprep.subr.bf16.mxu0 0
      %260 = vmatpush1.bf16.msra.mxu0 %v245
      %261 = vmatprep.subr.bf16.mxu0 0
      %262 = vmatpush1.bf16.msra.mxu0 %v255
      %263 = vmatprep.subr.bf16.mxu0 0
      %264 = vmatpush1.bf16.msra.mxu0 0
      %265 = vmatprep.subr.bf16.mxu0 0
      %266 = vmatpush1.bf16.msra.mxu0 0
      %267 = vmatprep.subr.bf16.mxu0 0
      %268 = vmatpush1.bf16.msra.mxu0 0
      %269 = vmatprep.subr.bf16.mxu0 0
      %270 = vmatpush1.bf16.msra.mxu0 0
      %271 = vmatprep.subr.bf16.mxu0 0
      %272 = vmatpush1.bf16.msra.mxu0 0
      %273 = vmatprep.subr.bf16.mxu0 0
      %274 = vmatpush1.bf16.msra.mxu0 0
      %275 = vmatprep.subr.bf16.mxu0 0
      %276 = vmatpush1.bf16.msra.mxu0 0
      %277 = vmatprep.subr.bf16.mxu0 0
      %278 = vmatpush1.bf16.msra.mxu0 0
      %279 = vmatprep.subr.bf16.mxu0 0
      %280 = vmatpush1.bf16.msra.mxu0 0
      %281 = vmatprep.subr.bf16.mxu0 0
      %282 = vmatpush1.bf16.msra.mxu0 0
      %283 = vmatprep.subr.bf16.mxu0 0
      %284 = vmatpush1.bf16.msra.mxu0 0
      %285 = vmatprep.subr.bf16.mxu0 0
      %286 = vmatpush1.bf16.msra.mxu0 0
      %287 = vmatprep.subr.bf16.mxu0 0
      %288 = vmatpush1.bf16.msra.mxu0 0
      %289 = vmatprep.mubr.bf16.mxu0 0
      %290 = vmatmul.mubr.bf16.gmra.mrb[0].mxu0 %v251
      %v291 = vpop.f32.mrb[0].mxu0
      %v292 = vadd.f32 0.0, %v291
      %v293 = vpop.f32.mrb[0].mxu0
      %v294 = vpop.f32.mrb[0].mxu0
      %v295 = vpop.f32.mrb[0].mxu0
      %296 = vdwg.mxu0
      %v297 = vld [vmem:[%s2] sm:$0xff]
      %299 = vset.pattern.permute.xlu0 0
      %300 = vperm.xlu0 %299, %v297
      %v301 = vpop.permute.xlu0 %300
      %v303 = vmul.f32 %v292, %v301
      %v304 = vld [vmem:[%s3] sm:$0xff]
      %306 = vset.pattern.permute.xlu0 0
      %307 = vperm.xlu0 %306, %v304
      %v308 = vpop.permute.xlu0 %307
      %v310 = vadd.f32 %v303, %v308
      %vm311 = vcmask 523264
      %312 = vst.msk [vmem:[%s226] sm:$0xff] %vm311, %v310
      %p313 = scmp.lt.s32.totalorder %s19, 1
      %s314 = scalar_select %p313, %s19, 1
      %p315 = scmp.lt.s32.totalorder %s20, 0
      %s316 = scalar_select %p315, %s20, 0
      %s317 = sadd.s32 %s316, %s314
      %s318 = smul.addr %s317, 8
      %s319 = scalar_lea.vmem %s4, %s318
      // Predicated region
      $region37: #{downsample.3} parent=35 // pred_check
        %p320 = pneg %p138
      $region38: #{downsample.3} parent=35 // pred_check_branch
        %322 = sbr.rel (%p320) target = $region40
      $region39: #{downsample.3} parent=35 // pred_region
        _
      $region40: #{downsample.3} parent=35 // pred_fallthru
        _
    $region36: #{downsample.3} parent=5 // pred_fallthru
      _
    %p323 = scmp.le.s32.totalorder 2, %s10
    // Predicated region
    $region41: #{downsample.3} parent=5 // pred_check
      %p324 = pneg %p323
    $region42: #{downsample.3} parent=5 // pred_check_branch
      %326 = sbr.rel (%p324) target = $region44
    $region43: #{downsample.3} parent=5 // pred_region
      %s327 = ssub.s32 %s10, 2
      // Predicated region
      $region45: #{downsample.3} parent=43 // pred_check
        %p328 = pneg %p144
      $region46: #{downsample.3} parent=43 // pred_check_branch
        %330 = sbr.rel (%p328) target = $region48
      $region47: #{downsample.3} parent=43 // pred_region
        %p331 = scmp.lt.s32.totalorder %s21, 1
        %s332 = scalar_select %p331, %s21, 1
        %p333 = scmp.lt.s32.totalorder %s22, 0
        %s334 = scalar_select %p333, %s22, 0
        %s335 = sadd.s32 %s334, %s332
        %s336 = smul.addr %s335, 8
        %s337 = scalar_lea.vmem %s4, %s336
      $region48: #{downsample.3} parent=43 // pred_fallthru
        _
    $region44: #{downsample.3} parent=5 // pred_fallthru
      _
  $region6: #{downsample.3} parent=0 // loop_footer
    %s14 = sadd.s32 1, %s10
  $region7: #{downsample.3} parent=0 // loop_footer_branch
    %9 = sbr.rel target = $region3
  $region8: #{downsample.3} parent=0 // loop_exit
    _

</llo_original>
